<compile_context>
chip_gen: v7x
topology: tpu7x:2x2x1
jax: 0.10.0
libtpu: 0.0.40
codegen_flags: <defaults>
</compile_context>

<pallas_src>
import math

import jax
import jax.numpy as jnp
from jax.experimental import pallas as pl
from jax.experimental.pallas import tpu as pltpu

PRIOR_MU = 0.0
PRIOR_SIGMA = 1.0

LANE = 128      # feature dim padded to a multiple of this (lane-dense stores)
SUBLANE = 8     # f32 sublane packing for the batch dim

# Padding value for rho such that softplus(_PAD_RHO) == PRIOR_SIGMA, i.e. the
# padded (mu=0, std=PRIOR_SIGMA) elements have exactly zero KL against the
# N(PRIOR_MU=0, PRIOR_SIGMA) prior -> no KL mask needed.  (Requires PRIOR_MU==0.)
_PAD_RHO = float(math.log(math.expm1(PRIOR_SIGMA)))


def _round_up(x, m):
    return (x + m - 1) // m * m


def _softplus(x):
    # Numerically stable log(1 + exp(x)) == torch.log(1 + torch.exp(rho)).
    return jnp.maximum(x, 0.0) + jnp.log(1.0 + jnp.exp(-jnp.abs(x)))


def _fused_res_block_kernel(x_ref,
                            w1_mu_ref, w1_rho_ref, b1_mu_ref, b1_rho_ref,
                            w2_mu_ref, w2_rho_ref, b2_mu_ref, b2_rho_ref,
                            eps_w1_ref, eps_b1_ref, eps_w2_ref, eps_b2_ref,
                            out_ref, kl_ref):
    x = x_ref[...]                                  # (Np, Dp) f32
    x_bf = x.astype(jnp.bfloat16)

    inv_two_var = 0.5 / (PRIOR_SIGMA * PRIOR_SIGMA)

    def sample_and_kl(mu_ref, rho_ref, eps_ref):
        mu = mu_ref[...]
        std = _softplus(rho_ref[...])
        w = mu + eps_ref[...] * std                 # reparameterized sample (f32)
        # KL( N(mu, std^2) || N(PRIOR_MU, PRIOR_SIGMA^2) ) per element.
        kl = (jnp.log(PRIOR_SIGMA / std)
              + (std * std + (mu - PRIOR_MU) ** 2) * inv_two_var
              - 0.5)
        return w, kl

    # ---------------- layer 1 ----------------
    w1, kl_w1 = sample_and_kl(w1_mu_ref, w1_rho_ref, eps_w1_ref)
    b1, kl_b1 = sample_and_kl(b1_mu_ref, b1_rho_ref, eps_b1_ref)
    # Fold layer-1 KL into a single (1, Dp) row before dot1 (only 1 vreg live).
    kl_row = jnp.sum(kl_w1, axis=0, keepdims=True) + kl_b1

    h = jnp.dot(x_bf, w1.astype(jnp.bfloat16),
                preferred_element_type=jnp.float32) + b1
    h = jnp.maximum(h, 0.0)                         # activation(layer1)

    # ------- layer 2 (sampled after dot1 so EUP/VPU work overlaps the MXU) -------
    w2, kl_w2 = sample_and_kl(w2_mu_ref, w2_rho_ref, eps_w2_ref)
    b2, kl_b2 = sample_and_kl(b2_mu_ref, b2_rho_ref, eps_b2_ref)
    kl_row = kl_row + jnp.sum(kl_w2, axis=0, keepdims=True) + kl_b2

    o = jnp.dot(h.astype(jnp.bfloat16), w2.astype(jnp.bfloat16),
                preferred_element_type=jnp.float32) + b2 + x
    out_ref[...] = jnp.maximum(o, 0.0)              # activation(out + residual)

    kl_ref[...] = jnp.sum(kl_row, axis=1, keepdims=True)   # (1, 1)


def _sample_eps(key, d):
    """N(0,1) epsilons for both layers' weights and biases (reparam trick)."""
    kw1, kb1, kw2, kb2 = jax.random.split(key, 4)
    return (jax.random.normal(kw1, (d, d), jnp.float32),
            jax.random.normal(kb1, (d,), jnp.float32),
            jax.random.normal(kw2, (d, d), jnp.float32),
            jax.random.normal(kb2, (d,), jnp.float32))


def res_block_forward(x, params1, params2, key):
    """params_i = (W_mu, W_rho, b_mu, b_rho). Returns (out, KL_total)."""
    n, d = x.shape
    dp = _round_up(d, LANE)
    n_p = _round_up(n, SUBLANE)
    needs_pad = (dp != d) or (n_p != n)

    def pad2(a, r, c, val=0.0):
        if a.shape == (r, c):
            return a
        return jnp.pad(a, ((0, r - a.shape[0]), (0, c - a.shape[1])),
                       constant_values=val)

    def pad_params(params):
        w_mu, w_rho, b_mu, b_rho = params
        # mu padded with 0, rho padded so softplus(pad)==PRIOR_SIGMA (KL term = 0).
        return (pad2(w_mu, dp, dp, 0.0),
                pad2(w_rho, dp, dp, _PAD_RHO),
                pad2(b_mu.reshape(1, d), 1, dp, 0.0),
                pad2(b_rho.reshape(1, d), 1, dp, _PAD_RHO))

    eps_w1, eps_b1, eps_w2, eps_b2 = _sample_eps(key, d)
    # eps padded with 0  ->  padded sampled weights are exactly mu(=0)+0*std = 0,
    # so no output masking is needed anywhere in the kernel.
    eps = (pad2(eps_w1, dp, dp, 0.0), pad2(eps_b1.reshape(1, d), 1, dp, 0.0),
           pad2(eps_w2, dp, dp, 0.0), pad2(eps_b2.reshape(1, d), 1, dp, 0.0))

    x_p = x if not needs_pad else pad2(x, n_p, dp, 0.0)
    p1 = pad_params(params1)
    p2 = pad_params(params2)

    vmem = pl.BlockSpec(memory_space=pltpu.MemorySpace.VMEM)

    n_param = 2 * (dp * dp + dp)            # mu elements over both layers
    cost = pl.CostEstimate(
        flops=4 * n_p * dp * dp + 12 * n_p * dp + 12 * n_param,
        transcendentals=2 * n_param,        # softplus exp + KL log
        bytes_accessed=4 * (2 * n_p * dp + 3 * n_param + 1),
    )

    out_p, kl = pl.pallas_call(
        _fused_res_block_kernel,
        out_shape=(jax.ShapeDtypeStruct((n_p, dp), jnp.float32),
                   jax.ShapeDtypeStruct((1, 1), jnp.float32)),
        in_specs=[vmem] * 13,
        out_specs=(vmem, vmem),
        cost_estimate=cost,
    )(x_p, *p1, *p2, *eps)

    out = out_p if not needs_pad else out_p[:n, :d]
    return out, kl[0, 0]


def init_bayes_linear(key, input_dim, output_dim):
    # Matches the PyTorch ctor's uniform initialization ranges.
    k1, k2, k3, k4 = jax.random.split(key, 4)
    w_mu = jax.random.uniform(k1, (input_dim, output_dim), jnp.float32, -0.05, 0.05)
    w_rho = jax.random.uniform(k2, (input_dim, output_dim), jnp.float32, -3.0, -2.0)
    b_mu = jax.random.uniform(k3, (output_dim,), jnp.float32, -0.05, 0.05)
    b_rho = jax.random.uniform(k4, (output_dim,), jnp.float32, -3.0, -2.0)
    return (w_mu, w_rho, b_mu, b_rho)


def _forward_reference(x, params1, params2, key):
    """Pure-JAX f32 reference with the SAME epsilons (checks output + KL)."""
    eps_w1, eps_b1, eps_w2, eps_b2 = _sample_eps(key, x.shape[1])

    def kl_term(mu, std):
        return jnp.sum(jnp.log(PRIOR_SIGMA / std)
                       + (std ** 2 + (mu - PRIOR_MU) ** 2) / (2.0 * PRIOR_SIGMA ** 2)
                       - 0.5)

    def layer(xin, params, eps_w, eps_b):
        w_mu, w_rho, b_mu, b_rho = params
        std_w = jnp.log1p(jnp.exp(w_rho))
        std_b = jnp.log1p(jnp.exp(b_rho))
        w = w_mu + eps_w * std_w
        b = b_mu + eps_b * std_b
        return xin @ w + b, kl_term(w_mu, std_w) + kl_term(b_mu, std_b)

    h, kl1 = layer(x, params1, eps_w1, eps_b1)
    h = jnp.maximum(h, 0.0)
    o, kl2 = layer(h, params2, eps_w2, eps_b2)
    return jnp.maximum(o + x, 0.0), kl1 + kl2


if __name__ == "__main__":
    key = jax.random.PRNGKey(0)
    k_x, k_p1, k_p2, k_eps = jax.random.split(key, 4)

    # Residual block requires input_dim == output_dim; small demo: batch=8, D=32.
    # The wrapper pads D 32 -> 128 internally so stores/matmuls are lane-dense.
    N, D = 8, 32
    x = jax.random.normal(k_x, (N, D), jnp.float32)
    params1 = init_bayes_linear(k_p1, D, D)
    params2 = init_bayes_linear(k_p2, D, D)

    fwd = jax.jit(res_block_forward)
    out, kl_total = fwd(x, params1, params2, k_eps)
    jax.block_until_ready((out, kl_total))

    assert out.shape == (N, D)
    assert kl_total.shape == ()
    assert bool(jnp.all(jnp.isfinite(out)))
    assert bool(jnp.all(out >= 0.0))          # final op is a ReLU

    out_ref, kl_ref = _forward_reference(x, params1, params2, k_eps)
    # KL is deterministic in (mu, rho) -> tight check.
    assert bool(jnp.allclose(kl_total, kl_ref, rtol=1e-4, atol=1e-2)), (kl_total, kl_ref)
    # Output uses bf16 MXU operands with f32 accumulation -> loose tolerance.
    assert bool(jnp.allclose(out, out_ref, rtol=3e-2, atol=3e-2)), (
        float(jnp.max(jnp.abs(out - out_ref))))

    print("KERNEL_OK")
</pallas_src>

<mosaic_0001>
module attributes {stable_mosaic.version = 11 : i64} {
  func.func @_fused_res_block_kernel(%arg0: memref<8x128xf32, #tpu.memory_space<vmem>>, %arg1: memref<128x128xf32, #tpu.memory_space<vmem>>, %arg2: memref<128x128xf32, #tpu.memory_space<vmem>>, %arg3: memref<1x128xf32, #tpu.memory_space<vmem>>, %arg4: memref<1x128xf32, #tpu.memory_space<vmem>>, %arg5: memref<128x128xf32, #tpu.memory_space<vmem>>, %arg6: memref<128x128xf32, #tpu.memory_space<vmem>>, %arg7: memref<1x128xf32, #tpu.memory_space<vmem>>, %arg8: memref<1x128xf32, #tpu.memory_space<vmem>>, %arg9: memref<128x128xf32, #tpu.memory_space<vmem>>, %arg10: memref<1x128xf32, #tpu.memory_space<vmem>>, %arg11: memref<128x128xf32, #tpu.memory_space<vmem>>, %arg12: memref<1x128xf32, #tpu.memory_space<vmem>>, %arg13: memref<8x128xf32, #tpu.memory_space<vmem>>, %arg14: memref<1x1xf32, #tpu.memory_space<vmem>>) attributes {dimension_semantics = [], scalar_prefetch = 0 : i64, scratch_operands = 0 : i64, tpu.core_type = #tpu.core_type<tc>} {
    %c0 = arith.constant 0 : index
    %c0_0 = arith.constant 0 : index
    %0 = vector.load %arg0[%c0, %c0_0] : memref<8x128xf32, #tpu.memory_space<vmem>>, vector<8x128xf32>
    %1 = arith.truncf %0 : vector<8x128xf32> to vector<8x128xbf16>
    %c0_1 = arith.constant 0 : index
    %c0_2 = arith.constant 0 : index
    %2 = vector.load %arg1[%c0_1, %c0_2] : memref<128x128xf32, #tpu.memory_space<vmem>>, vector<128x128xf32>
    %c0_3 = arith.constant 0 : index
    %c0_4 = arith.constant 0 : index
    %3 = vector.load %arg2[%c0_3, %c0_4] : memref<128x128xf32, #tpu.memory_space<vmem>>, vector<128x128xf32>
    %cst = arith.constant 0.000000e+00 : f32
    %4 = vector.broadcast %cst : f32 to vector<128x128xf32>
    %5 = arith.maximumf %3, %4 : vector<128x128xf32>
    %6 = math.absf %3 : vector<128x128xf32>
    %cst_5 = arith.constant 0.000000e+00 : f32
    %7 = vector.broadcast %cst_5 : f32 to vector<128x128xf32>
    %8 = arith.subf %7, %6 : vector<128x128xf32>
    %9 = math.exp %8 : vector<128x128xf32>
    %cst_6 = arith.constant 1.000000e+00 : f32
    %10 = vector.broadcast %cst_6 : f32 to vector<128x128xf32>
    %11 = arith.addf %10, %9 : vector<128x128xf32>
    %12 = math.log %11 : vector<128x128xf32>
    %13 = arith.addf %5, %12 : vector<128x128xf32>
    %c0_7 = arith.constant 0 : index
    %c0_8 = arith.constant 0 : index
    %14 = vector.load %arg9[%c0_7, %c0_8] : memref<128x128xf32, #tpu.memory_space<vmem>>, vector<128x128xf32>
    %15 = arith.mulf %14, %13 : vector<128x128xf32>
    %16 = arith.addf %2, %15 : vector<128x128xf32>
    %cst_9 = arith.constant 1.000000e+00 : f32
    %17 = vector.broadcast %cst_9 : f32 to vector<128x128xf32>
    %18 = arith.divf %17, %13 : vector<128x128xf32>
    %19 = math.log %18 : vector<128x128xf32>
    %20 = arith.mulf %13, %13 : vector<128x128xf32>
    %cst_10 = arith.constant 0.000000e+00 : f32
    %21 = vector.broadcast %cst_10 : f32 to vector<128x128xf32>
    %22 = arith.subf %2, %21 : vector<128x128xf32>
    %23 = arith.mulf %22, %22 : vector<128x128xf32>
    %24 = arith.addf %20, %23 : vector<128x128xf32>
    %cst_11 = arith.constant 5.000000e-01 : f32
    %25 = vector.broadcast %cst_11 : f32 to vector<128x128xf32>
    %26 = arith.mulf %24, %25 : vector<128x128xf32>
    %27 = arith.addf %19, %26 : vector<128x128xf32>
    %cst_12 = arith.constant 5.000000e-01 : f32
    %28 = vector.broadcast %cst_12 : f32 to vector<128x128xf32>
    %29 = arith.subf %27, %28 : vector<128x128xf32>
    %c0_13 = arith.constant 0 : index
    %c0_14 = arith.constant 0 : index
    %30 = vector.load %arg3[%c0_13, %c0_14] : memref<1x128xf32, #tpu.memory_space<vmem>>, vector<1x128xf32>
    %c0_15 = arith.constant 0 : index
    %c0_16 = arith.constant 0 : index
    %31 = vector.load %arg4[%c0_15, %c0_16] : memref<1x128xf32, #tpu.memory_space<vmem>>, vector<1x128xf32>
    %cst_17 = arith.constant 0.000000e+00 : f32
    %32 = vector.broadcast %cst_17 : f32 to vector<1x128xf32>
    %33 = arith.maximumf %31, %32 : vector<1x128xf32>
    %34 = math.absf %31 : vector<1x128xf32>
    %cst_18 = arith.constant 0.000000e+00 : f32
    %35 = vector.broadcast %cst_18 : f32 to vector<1x128xf32>
    %36 = arith.subf %35, %34 : vector<1x128xf32>
    %37 = math.exp %36 : vector<1x128xf32>
    %cst_19 = arith.constant 1.000000e+00 : f32
    %38 = vector.broadcast %cst_19 : f32 to vector<1x128xf32>
    %39 = arith.addf %38, %37 : vector<1x128xf32>
    %40 = math.log %39 : vector<1x128xf32>
    %41 = arith.addf %33, %40 : vector<1x128xf32>
    %c0_20 = arith.constant 0 : index
    %c0_21 = arith.constant 0 : index
    %42 = vector.load %arg10[%c0_20, %c0_21] : memref<1x128xf32, #tpu.memory_space<vmem>>, vector<1x128xf32>
    %43 = arith.mulf %42, %41 : vector<1x128xf32>
    %44 = arith.addf %30, %43 : vector<1x128xf32>
    %cst_22 = arith.constant 1.000000e+00 : f32
    %45 = vector.broadcast %cst_22 : f32 to vector<1x128xf32>
    %46 = arith.divf %45, %41 : vector<1x128xf32>
    %47 = math.log %46 : vector<1x128xf32>
    %48 = arith.mulf %41, %41 : vector<1x128xf32>
    %cst_23 = arith.constant 0.000000e+00 : f32
    %49 = vector.broadcast %cst_23 : f32 to vector<1x128xf32>
    %50 = arith.subf %30, %49 : vector<1x128xf32>
    %51 = arith.mulf %50, %50 : vector<1x128xf32>
    %52 = arith.addf %48, %51 : vector<1x128xf32>
    %cst_24 = arith.constant 5.000000e-01 : f32
    %53 = vector.broadcast %cst_24 : f32 to vector<1x128xf32>
    %54 = arith.mulf %52, %53 : vector<1x128xf32>
    %55 = arith.addf %47, %54 : vector<1x128xf32>
    %cst_25 = arith.constant 5.000000e-01 : f32
    %56 = vector.broadcast %cst_25 : f32 to vector<1x128xf32>
    %57 = arith.subf %55, %56 : vector<1x128xf32>
    %cst_26 = arith.constant dense<0.000000e+00> : vector<128xf32>
    %58 = vector.multi_reduction <add>, %29, %cst_26 [0] : vector<128x128xf32> to vector<128xf32>
    %59 = vector.shape_cast %58 : vector<128xf32> to vector<1x128xf32>
    %60 = arith.addf %59, %57 : vector<1x128xf32>
    %61 = arith.truncf %16 : vector<128x128xf32> to vector<128x128xbf16>
    %cst_27 = arith.constant dense<0.000000e+00> : vector<8x128xf32>
    %62 = tpu.matmul %1, %61, %cst_27 {dimension_numbers = #tpu.dot_dimension_numbers<[1], [0], [0], [1], [0, 0, 1, 1], [], []>} : vector<8x128xbf16>, vector<128x128xbf16>, vector<8x128xf32> -> vector<8x128xf32>
    %63 = vector.broadcast %44 : vector<1x128xf32> to vector<8x128xf32>
    %64 = arith.addf %62, %63 : vector<8x128xf32>
    %cst_28 = arith.constant 0.000000e+00 : f32
    %65 = vector.broadcast %cst_28 : f32 to vector<8x128xf32>
    %66 = arith.maximumf %64, %65 : vector<8x128xf32>
    %c0_29 = arith.constant 0 : index
    %c0_30 = arith.constant 0 : index
    %67 = vector.load %arg5[%c0_29, %c0_30] : memref<128x128xf32, #tpu.memory_space<vmem>>, vector<128x128xf32>
    %c0_31 = arith.constant 0 : index
    %c0_32 = arith.constant 0 : index
    %68 = vector.load %arg6[%c0_31, %c0_32] : memref<128x128xf32, #tpu.memory_space<vmem>>, vector<128x128xf32>
    %cst_33 = arith.constant 0.000000e+00 : f32
    %69 = vector.broadcast %cst_33 : f32 to vector<128x128xf32>
    %70 = arith.maximumf %68, %69 : vector<128x128xf32>
    %71 = math.absf %68 : vector<128x128xf32>
    %cst_34 = arith.constant 0.000000e+00 : f32
    %72 = vector.broadcast %cst_34 : f32 to vector<128x128xf32>
    %73 = arith.subf %72, %71 : vector<128x128xf32>
    %74 = math.exp %73 : vector<128x128xf32>
    %cst_35 = arith.constant 1.000000e+00 : f32
    %75 = vector.broadcast %cst_35 : f32 to vector<128x128xf32>
    %76 = arith.addf %75, %74 : vector<128x128xf32>
    %77 = math.log %76 : vector<128x128xf32>
    %78 = arith.addf %70, %77 : vector<128x128xf32>
    %c0_36 = arith.constant 0 : index
    %c0_37 = arith.constant 0 : index
    %79 = vector.load %arg11[%c0_36, %c0_37] : memref<128x128xf32, #tpu.memory_space<vmem>>, vector<128x128xf32>
    %80 = arith.mulf %79, %78 : vector<128x128xf32>
    %81 = arith.addf %67, %80 : vector<128x128xf32>
    %cst_38 = arith.constant 1.000000e+00 : f32
    %82 = vector.broadcast %cst_38 : f32 to vector<128x128xf32>
    %83 = arith.divf %82, %78 : vector<128x128xf32>
    %84 = math.log %83 : vector<128x128xf32>
    %85 = arith.mulf %78, %78 : vector<128x128xf32>
    %cst_39 = arith.constant 0.000000e+00 : f32
    %86 = vector.broadcast %cst_39 : f32 to vector<128x128xf32>
    %87 = arith.subf %67, %86 : vector<128x128xf32>
    %88 = arith.mulf %87, %87 : vector<128x128xf32>
    %89 = arith.addf %85, %88 : vector<128x128xf32>
    %cst_40 = arith.constant 5.000000e-01 : f32
    %90 = vector.broadcast %cst_40 : f32 to vector<128x128xf32>
    %91 = arith.mulf %89, %90 : vector<128x128xf32>
    %92 = arith.addf %84, %91 : vector<128x128xf32>
    %cst_41 = arith.constant 5.000000e-01 : f32
    %93 = vector.broadcast %cst_41 : f32 to vector<128x128xf32>
    %94 = arith.subf %92, %93 : vector<128x128xf32>
    %c0_42 = arith.constant 0 : index
    %c0_43 = arith.constant 0 : index
    %95 = vector.load %arg7[%c0_42, %c0_43] : memref<1x128xf32, #tpu.memory_space<vmem>>, vector<1x128xf32>
    %c0_44 = arith.constant 0 : index
    %c0_45 = arith.constant 0 : index
    %96 = vector.load %arg8[%c0_44, %c0_45] : memref<1x128xf32, #tpu.memory_space<vmem>>, vector<1x128xf32>
    %cst_46 = arith.constant 0.000000e+00 : f32
    %97 = vector.broadcast %cst_46 : f32 to vector<1x128xf32>
    %98 = arith.maximumf %96, %97 : vector<1x128xf32>
    %99 = math.absf %96 : vector<1x128xf32>
    %cst_47 = arith.constant 0.000000e+00 : f32
    %100 = vector.broadcast %cst_47 : f32 to vector<1x128xf32>
    %101 = arith.subf %100, %99 : vector<1x128xf32>
    %102 = math.exp %101 : vector<1x128xf32>
    %cst_48 = arith.constant 1.000000e+00 : f32
    %103 = vector.broadcast %cst_48 : f32 to vector<1x128xf32>
    %104 = arith.addf %103, %102 : vector<1x128xf32>
    %105 = math.log %104 : vector<1x128xf32>
    %106 = arith.addf %98, %105 : vector<1x128xf32>
    %c0_49 = arith.constant 0 : index
    %c0_50 = arith.constant 0 : index
    %107 = vector.load %arg12[%c0_49, %c0_50] : memref<1x128xf32, #tpu.memory_space<vmem>>, vector<1x128xf32>
    %108 = arith.mulf %107, %106 : vector<1x128xf32>
    %109 = arith.addf %95, %108 : vector<1x128xf32>
    %cst_51 = arith.constant 1.000000e+00 : f32
    %110 = vector.broadcast %cst_51 : f32 to vector<1x128xf32>
    %111 = arith.divf %110, %106 : vector<1x128xf32>
    %112 = math.log %111 : vector<1x128xf32>
    %113 = arith.mulf %106, %106 : vector<1x128xf32>
    %cst_52 = arith.constant 0.000000e+00 : f32
    %114 = vector.broadcast %cst_52 : f32 to vector<1x128xf32>
    %115 = arith.subf %95, %114 : vector<1x128xf32>
    %116 = arith.mulf %115, %115 : vector<1x128xf32>
    %117 = arith.addf %113, %116 : vector<1x128xf32>
    %cst_53 = arith.constant 5.000000e-01 : f32
    %118 = vector.broadcast %cst_53 : f32 to vector<1x128xf32>
    %119 = arith.mulf %117, %118 : vector<1x128xf32>
    %120 = arith.addf %112, %119 : vector<1x128xf32>
    %cst_54 = arith.constant 5.000000e-01 : f32
    %121 = vector.broadcast %cst_54 : f32 to vector<1x128xf32>
    %122 = arith.subf %120, %121 : vector<1x128xf32>
    %cst_55 = arith.constant dense<0.000000e+00> : vector<128xf32>
    %123 = vector.multi_reduction <add>, %94, %cst_55 [0] : vector<128x128xf32> to vector<128xf32>
    %124 = vector.shape_cast %123 : vector<128xf32> to vector<1x128xf32>
    %125 = arith.addf %60, %124 : vector<1x128xf32>
    %126 = arith.addf %125, %122 : vector<1x128xf32>
    %127 = arith.truncf %66 : vector<8x128xf32> to vector<8x128xbf16>
    %128 = arith.truncf %81 : vector<128x128xf32> to vector<128x128xbf16>
    %cst_56 = arith.constant dense<0.000000e+00> : vector<8x128xf32>
    %129 = tpu.matmul %127, %128, %cst_56 {dimension_numbers = #tpu.dot_dimension_numbers<[1], [0], [0], [1], [0, 0, 1, 1], [], []>} : vector<8x128xbf16>, vector<128x128xbf16>, vector<8x128xf32> -> vector<8x128xf32>
    %130 = vector.broadcast %109 : vector<1x128xf32> to vector<8x128xf32>
    %131 = arith.addf %129, %130 : vector<8x128xf32>
    %132 = arith.addf %131, %0 : vector<8x128xf32>
    %cst_57 = arith.constant 0.000000e+00 : f32
    %133 = vector.broadcast %cst_57 : f32 to vector<8x128xf32>
    %134 = arith.maximumf %132, %133 : vector<8x128xf32>
    %c0_58 = arith.constant 0 : index
    %c0_59 = arith.constant 0 : index
    %135 = vector.load %arg13[%c0_58, %c0_59] : memref<8x128xf32, #tpu.memory_space<vmem>>, vector<8x128xf32>
    tpu.vector_store %arg13[%c0_58, %c0_59], %134 {strides = array<i32>} : memref<8x128xf32, #tpu.memory_space<vmem>>, vector<8x128xf32>,
    %cst_60 = arith.constant dense<0.000000e+00> : vector<1xf32>
    %136 = vector.multi_reduction <add>, %126, %cst_60 [1] : vector<1x128xf32> to vector<1xf32>
    %137 = vector.shape_cast %136 : vector<1xf32> to vector<1x1xf32>
    %c0_61 = arith.constant 0 : index
    %c0_62 = arith.constant 0 : index
    %138 = vector.load %arg14[%c0_61, %c0_62] : memref<1x1xf32, #tpu.memory_space<vmem>>, vector<1x1xf32>
    tpu.vector_store %arg14[%c0_61, %c0_62], %137 {strides = array<i32>} : memref<1x1xf32, #tpu.memory_space<vmem>>, vector<1x1xf32>,
    return
  }
}

</mosaic_0001>

<llo_original>
// kernel: res_block_forward.1
$region0: #{res_block_forward.1}
  #allocation0 [shape = 'u32[]', space=smem, size = 0x4, offset = 0x4, fixed_abs, tag = 'smem constant byte address 0x4 - core index']
  #allocation1 [shape = 'u32[144,128]{1,0:T(1,128)}', space=vmem, size = 0x12000, scoped, tag = 'internal scratch']
  %s0 = inlined_call_operand.vmem [shape: f32[8,128], index: 0, kind: input, shape index: {}]
  %s1 = inlined_call_operand.vmem [shape: f32[128,128], index: 1, kind: input, shape index: {}]
  %s2 = inlined_call_operand.vmem [shape: f32[128,128], index: 2, kind: input, shape index: {}]
  %s3 = inlined_call_operand.vmem [shape: f32[1,128], index: 3, kind: input, shape index: {}]
  %s4 = inlined_call_operand.vmem [shape: f32[1,128], index: 4, kind: input, shape index: {}]
  %s5 = inlined_call_operand.vmem [shape: f32[128,128], index: 5, kind: input, shape index: {}]
  %s6 = inlined_call_operand.vmem [shape: f32[128,128], index: 6, kind: input, shape index: {}]
  %s7 = inlined_call_operand.vmem [shape: f32[1,128], index: 7, kind: input, shape index: {}]
  %s8 = inlined_call_operand.vmem [shape: f32[1,128], index: 8, kind: input, shape index: {}]
  %s9 = inlined_call_operand.vmem [shape: f32[128,128], index: 9, kind: input, shape index: {}]
  %s10 = inlined_call_operand.vmem [shape: f32[1,128], index: 10, kind: input, shape index: {}]
  %s11 = inlined_call_operand.vmem [shape: f32[128,128], index: 11, kind: input, shape index: {}]
  %s12 = inlined_call_operand.vmem [shape: f32[1,128], index: 12, kind: input, shape index: {}]
  %s13 = inlined_call_operand.hbm [shape: f32[8,128], index: 13, kind: output, shape index: {0}]
  %s14 = inlined_call_operand.hbm [shape: f32[1,1], index: 14, kind: output, shape index: {1}]
  %15 = xla_tuple %s13, %s14
  %s16 = sld [smem:[#allocation0]]
  $region70: #{res_block_forward.1} parent=0
    _
  %s18 = ssub.s32 1, %s16
  %s19 = scalar_select 0, %s18, %s16
  $region1: #{res_block_forward.1} parent=0
    #allocation2 [shape = 'u8[4096]{0}', space=vmem, size = 0x1000, scoped, tag = 'output window, operand 0, single buffered']
    #allocation3 [shape = 's32[1]{0}', space=sflag, size = 0x4, scoped, tag = 'scoped memory for res_block_forward.1']
    #allocation4 [shape = 'u8[512]{0}', space=vmem, size = 0x400, scoped, tag = 'output window, operand 1, single buffered']
    #allocation5 [shape = 's32[1]{0}', space=sflag, size = 0x4, scoped, tag = 'scoped memory for res_block_forward.1']
    %20 = vsyncpa [#allocation3], 0
    %21 = vsyncpa [#allocation5], 0
    // Predicated region
    $region2: #{res_block_forward.1} parent=1 // pred_check
      _
    $region3: #{res_block_forward.1} parent=1 // pred_check_branch
      %23 = sbr.rel (0) target = $region5
    $region4: #{res_block_forward.1} parent=1 // pred_region
      _
    $region5: #{res_block_forward.1} parent=1 // pred_fallthru
      _
    // Predicated region
    $region6: #{res_block_forward.1} parent=1 // pred_check
      _
    $region7: #{res_block_forward.1} parent=1 // pred_check_branch
      %25 = sbr.rel (0) target = $region9
    $region8: #{res_block_forward.1} parent=1 // pred_region
      _
    $region9: #{res_block_forward.1} parent=1 // pred_fallthru
      _
    // Predicated region
    $region10: #{res_block_forward.1} parent=1 // pred_check
      _
    $region11: #{res_block_forward.1} parent=1 // pred_check_branch
      %27 = sbr.rel (0) target = $region13
    $region12: #{res_block_forward.1} parent=1 // pred_region
      _
    $region13: #{res_block_forward.1} parent=1 // pred_fallthru
      _
    // Predicated region
    $region14: #{res_block_forward.1} parent=1 // pred_check
      _
    $region15: #{res_block_forward.1} parent=1 // pred_check_branch
      %29 = sbr.rel (0) target = $region17
    $region16: #{res_block_forward.1} parent=1 // pred_region
      _
    $region17: #{res_block_forward.1} parent=1 // pred_fallthru
      _
    // Predicated region
    $region18: #{res_block_forward.1} parent=1 // pred_check
      _
    $region19: #{res_block_forward.1} parent=1 // pred_check_branch
      %31 = sbr.rel (0) target = $region21
    $region20: #{res_block_forward.1} parent=1 // pred_region
      _
    $region21: #{res_block_forward.1} parent=1 // pred_fallthru
      _
    // Predicated region
    $region22: #{res_block_forward.1} parent=1 // pred_check
      _
    $region23: #{res_block_forward.1} parent=1 // pred_check_branch
      %33 = sbr.rel (0) target = $region25
    $region24: #{res_block_forward.1} parent=1 // pred_region
      _
    $region25: #{res_block_forward.1} parent=1 // pred_fallthru
      _
    // Predicated region
    $region26: #{res_block_forward.1} parent=1 // pred_check
      _
    $region27: #{res_block_forward.1} parent=1 // pred_check_branch
      %35 = sbr.rel (0) target = $region29
    $region28: #{res_block_forward.1} parent=1 // pred_region
      _
    $region29: #{res_block_forward.1} parent=1 // pred_fallthru
      _
    // Predicated region
    $region30: #{res_block_forward.1} parent=1 // pred_check
      _
    $region31: #{res_block_forward.1} parent=1 // pred_check_branch
      %37 = sbr.rel (0) target = $region33
    $region32: #{res_block_forward.1} parent=1 // pred_region
      _
    $region33: #{res_block_forward.1} parent=1 // pred_fallthru
      _
    // Predicated region
    $region34: #{res_block_forward.1} parent=1 // pred_check
      _
    $region35: #{res_block_forward.1} parent=1 // pred_check_branch
      %39 = sbr.rel (0) target = $region37
    $region36: #{res_block_forward.1} parent=1 // pred_region
      _
    $region37: #{res_block_forward.1} parent=1 // pred_fallthru
      _
    // Predicated region
    $region38: #{res_block_forward.1} parent=1 // pred_check
      _
    $region39: #{res_block_forward.1} parent=1 // pred_check_branch
      %41 = sbr.rel (0) target = $region41
    $region40: #{res_block_forward.1} parent=1 // pred_region
      _
    $region41: #{res_block_forward.1} parent=1 // pred_fallthru
      _
    // Predicated region
    $region42: #{res_block_forward.1} parent=1 // pred_check
      _
    $region43: #{res_block_forward.1} parent=1 // pred_check_branch
      %43 = sbr.rel (0) target = $region45
    $region44: #{res_block_forward.1} parent=1 // pred_region
      _
    $region45: #{res_block_forward.1} parent=1 // pred_fallthru
      _
    // Predicated region
    $region46: #{res_block_forward.1} parent=1 // pred_check
      _
    $region47: #{res_block_forward.1} parent=1 // pred_check_branch
      %45 = sbr.rel (0) target = $region49
    $region48: #{res_block_forward.1} parent=1 // pred_region
      _
    $region49: #{res_block_forward.1} parent=1 // pred_fallthru
      _
    // Predicated region
    $region50: #{res_block_forward.1} parent=1 // pred_check
      _
    $region51: #{res_block_forward.1} parent=1 // pred_check_branch
      %47 = sbr.rel (0) target = $region53
    $region52: #{res_block_forward.1} parent=1 // pred_region
      _
    $region53: #{res_block_forward.1} parent=1 // pred_fallthru
      _
    %v49 = vld [vmem:[%s0] sm:$0xff]
    %v50 = vpack.c.bf16 %v49, %v49
    %v51 = vld [vmem:[%s1] sm:$0xff]
    %v52 = vld [vmem:[%s1 + $0x8] sm:$0xff]
    %v53 = vld [vmem:[%s1 + $0x10] sm:$0xff]
    %v54 = vld [vmem:[%s1 + $0x18] sm:$0xff]
    %v55 = vld [vmem:[%s1 + $0x20] sm:$0xff]
    %v56 = vld [vmem:[%s1 + $0x28] sm:$0xff]
    %v57 = vld [vmem:[%s1 + $0x30] sm:$0xff]
    %v58 = vld [vmem:[%s1 + $0x38] sm:$0xff]
    %v59 = vld [vmem:[%s1 + $0x40] sm:$0xff]
    %v60 = vld [vmem:[%s1 + $0x48] sm:$0xff]
    %v61 = vld [vmem:[%s1 + $0x50] sm:$0xff]
    %v62 = vld [vmem:[%s1 + $0x58] sm:$0xff]
    %v63 = vld [vmem:[%s1 + $0x60] sm:$0xff]
    %v64 = vld [vmem:[%s1 + $0x68] sm:$0xff]
    %v65 = vld [vmem:[%s1 + $0x70] sm:$0xff]
    %v66 = vld [vmem:[%s1 + $0x78] sm:$0xff]
    %v67 = vld [vmem:[%s2] sm:$0xff]
    %v68 = vld [vmem:[%s2 + $0x8] sm:$0xff]
    %v69 = vld [vmem:[%s2 + $0x10] sm:$0xff]
    %v70 = vld [vmem:[%s2 + $0x18] sm:$0xff]
    %v71 = vld [vmem:[%s2 + $0x20] sm:$0xff]
    %v72 = vld [vmem:[%s2 + $0x28] sm:$0xff]
    %v73 = vld [vmem:[%s2 + $0x30] sm:$0xff]
    %v74 = vld [vmem:[%s2 + $0x38] sm:$0xff]
    %v75 = vld [vmem:[%s2 + $0x40] sm:$0xff]
    %v76 = vld [vmem:[%s2 + $0x48] sm:$0xff]
    %v77 = vld [vmem:[%s2 + $0x50] sm:$0xff]
    %v78 = vld [vmem:[%s2 + $0x58] sm:$0xff]
    %v79 = vld [vmem:[%s2 + $0x60] sm:$0xff]
    %v80 = vld [vmem:[%s2 + $0x68] sm:$0xff]
    %v81 = vld [vmem:[%s2 + $0x70] sm:$0xff]
    %v82 = vld [vmem:[%s2 + $0x78] sm:$0xff]
    %v83 = vmax.f32 %v67, 0.0
    %v84 = vmax.f32 %v68, 0.0
    %v85 = vmax.f32 %v69, 0.0
    %v86 = vmax.f32 %v70, 0.0
    %v87 = vmax.f32 %v71, 0.0
    %v88 = vmax.f32 %v72, 0.0
    %v89 = vmax.f32 %v73, 0.0
    %v90 = vmax.f32 %v74, 0.0
    %v91 = vmax.f32 %v75, 0.0
    %v92 = vmax.f32 %v76, 0.0
    %v93 = vmax.f32 %v77, 0.0
    %v94 = vmax.f32 %v78, 0.0
    %v95 = vmax.f32 %v79, 0.0
    %v96 = vmax.f32 %v80, 0.0
    %v97 = vmax.f32 %v81, 0.0
    %v98 = vmax.f32 %v82, 0.0
    %v99 = vand.u32 2147483647, %v67
    %v100 = vand.u32 2147483647, %v68
    %v101 = vand.u32 2147483647, %v69
    %v102 = vand.u32 2147483647, %v70
    %v103 = vand.u32 2147483647, %v71
    %v104 = vand.u32 2147483647, %v72
    %v105 = vand.u32 2147483647, %v73
    %v106 = vand.u32 2147483647, %v74
    %v107 = vand.u32 2147483647, %v75
    %v108 = vand.u32 2147483647, %v76
    %v109 = vand.u32 2147483647, %v77
    %v110 = vand.u32 2147483647, %v78
    %v111 = vand.u32 2147483647, %v79
    %v112 = vand.u32 2147483647, %v80
    %v113 = vand.u32 2147483647, %v81
    %v114 = vand.u32 2147483647, %v82
    %v115 = vsub.f32 0.0, %v99
    %v116 = vsub.f32 0.0, %v100
    %v117 = vsub.f32 0.0, %v101
    %v118 = vsub.f32 0.0, %v102
    %v119 = vsub.f32 0.0, %v103
    %v120 = vsub.f32 0.0, %v104
    %v121 = vsub.f32 0.0, %v105
    %v122 = vsub.f32 0.0, %v106
    %v123 = vsub.f32 0.0, %v107
    %v124 = vsub.f32 0.0, %v108
    %v125 = vsub.f32 0.0, %v109
    %v126 = vsub.f32 0.0, %v110
    %v127 = vsub.f32 0.0, %v111
    %v128 = vsub.f32 0.0, %v112
    %v129 = vsub.f32 0.0, %v113
    %v130 = vsub.f32 0.0, %v114
    %v131 = vmul.f32 %v115, 1.442695
    %v132 = vpow.pop %v131
    %v133 = vmul.f32 %v116, 1.442695
    %v134 = vpow.pop %v133
    %v135 = vmul.f32 %v117, 1.442695
    %v136 = vpow.pop %v135
    %v137 = vmul.f32 %v118, 1.442695
    %v138 = vpow.pop %v137
    %v139 = vmul.f32 %v119, 1.442695
    %v140 = vpow.pop %v139
    %v141 = vmul.f32 %v120, 1.442695
    %v142 = vpow.pop %v141
    %v143 = vmul.f32 %v121, 1.442695
    %v144 = vpow.pop %v143
    %v145 = vmul.f32 %v122, 1.442695
    %v146 = vpow.pop %v145
    %v147 = vmul.f32 %v123, 1.442695
    %v148 = vpow.pop %v147
    %v149 = vmul.f32 %v124, 1.442695
    %v150 = vpow.pop %v149
    %v151 = vmul.f32 %v125, 1.442695
    %v152 = vpow.pop %v151
    %v153 = vmul.f32 %v126, 1.442695
    %v154 = vpow.pop %v153
    %v155 = vmul.f32 %v127, 1.442695
    %v156 = vpow.pop %v155
    %v157 = vmul.f32 %v128, 1.442695
    %v158 = vpow.pop %v157
    %v159 = vmul.f32 %v129, 1.442695
    %v160 = vpow.pop %v159
    %v161 = vmul.f32 %v130, 1.442695
    %v162 = vpow.pop %v161
    %v163 = vadd.f32 %v132, 1.0
    %v164 = vadd.f32 %v134, 1.0
    %v165 = vadd.f32 %v136, 1.0
    %v166 = vadd.f32 %v138, 1.0
    %v167 = vadd.f32 %v140, 1.0
    %v168 = vadd.f32 %v142, 1.0
    %v169 = vadd.f32 %v144, 1.0
    %v170 = vadd.f32 %v146, 1.0
    %v171 = vadd.f32 %v148, 1.0
    %v172 = vadd.f32 %v150, 1.0
    %v173 = vadd.f32 %v152, 1.0
    %v174 = vadd.f32 %v154, 1.0
    %v175 = vadd.f32 %v156, 1.0
    %v176 = vadd.f32 %v158, 1.0
    %v177 = vadd.f32 %v160, 1.0
    %v178 = vadd.f32 %v162, 1.0
    %v179 = vlog2.pop %v163
    %v180 = vmul.f32 %v179, 0.6931472
    %v181 = vlog2.pop %v164
    %v182 = vmul.f32 %v181, 0.6931472
    %v183 = vlog2.pop %v165
    %v184 = vmul.f32 %v183, 0.6931472
    %v185 = vlog2.pop %v166
    %v186 = vmul.f32 %v185, 0.6931472
    %v187 = vlog2.pop %v167
    %v188 = vmul.f32 %v187, 0.6931472
    %v189 = vlog2.pop %v168
    %v190 = vmul.f32 %v189, 0.6931472
    %v191 = vlog2.pop %v169
    %v192 = vmul.f32 %v191, 0.6931472
    %v193 = vlog2.pop %v170
    %v194 = vmul.f32 %v193, 0.6931472
    %v195 = vlog2.pop %v171
    %v196 = vmul.f32 %v195, 0.6931472
    %v197 = vlog2.pop %v172
    %v198 = vmul.f32 %v197, 0.6931472
    %v199 = vlog2.pop %v173
    %v200 = vmul.f32 %v199, 0.6931472
    %v201 = vlog2.pop %v174
    %v202 = vmul.f32 %v201, 0.6931472
    %v203 = vlog2.pop %v175
    %v204 = vmul.f32 %v203, 0.6931472
    %v205 = vlog2.pop %v176
    %v206 = vmul.f32 %v205, 0.6931472
    %v207 = vlog2.pop %v177
    %v208 = vmul.f32 %v207, 0.6931472
    %v209 = vlog2.pop %v178
    %v210 = vmul.f32 %v209, 0.6931472
    %v211 = vadd.f32 %v83, %v180
    %v212 = vadd.f32 %v84, %v182
    %v213 = vadd.f32 %v85, %v184
    %v214 = vadd.f32 %v86, %v186
    %v215 = vadd.f32 %v87, %v188
    %v216 = vadd.f32 %v88, %v190
    %v217 = vadd.f32 %v89, %v192
    %v218 = vadd.f32 %v90, %v194
    %v219 = vadd.f32 %v91, %v196
    %v220 = vadd.f32 %v92, %v198
    %v221 = vadd.f32 %v93, %v200
    %v222 = vadd.f32 %v94, %v202
    %v223 = vadd.f32 %v95, %v204
    %v224 = vadd.f32 %v96, %v206
    %v225 = vadd.f32 %v97, %v208
    %v226 = vadd.f32 %v98, %v210
    %v227 = vld [vmem:[%s9] sm:$0xff]
    %v228 = vld [vmem:[%s9 + $0x8] sm:$0xff]
    %v229 = vld [vmem:[%s9 + $0x10] sm:$0xff]
    %v230 = vld [vmem:[%s9 + $0x18] sm:$0xff]
    %v231 = vld [vmem:[%s9 + $0x20] sm:$0xff]
    %v232 = vld [vmem:[%s9 + $0x28] sm:$0xff]
    %v233 = vld [vmem:[%s9 + $0x30] sm:$0xff]
    %v234 = vld [vmem:[%s9 + $0x38] sm:$0xff]
    %v235 = vld [vmem:[%s9 + $0x40] sm:$0xff]
    %v236 = vld [vmem:[%s9 + $0x48] sm:$0xff]
    %v237 = vld [vmem:[%s9 + $0x50] sm:$0xff]
    %v238 = vld [vmem:[%s9 + $0x58] sm:$0xff]
    %v239 = vld [vmem:[%s9 + $0x60] sm:$0xff]
    %v240 = vld [vmem:[%s9 + $0x68] sm:$0xff]
    %v241 = vld [vmem:[%s9 + $0x70] sm:$0xff]
    %v242 = vld [vmem:[%s9 + $0x78] sm:$0xff]
    %v243 = vmul.f32 %v227, %v211
    %v244 = vmul.f32 %v228, %v212
    %v245 = vmul.f32 %v229, %v213
    %v246 = vmul.f32 %v230, %v214
    %v247 = vmul.f32 %v231, %v215
    %v248 = vmul.f32 %v232, %v216
    %v249 = vmul.f32 %v233, %v217
    %v250 = vmul.f32 %v234, %v218
    %v251 = vmul.f32 %v235, %v219
    %v252 = vmul.f32 %v236, %v220
    %v253 = vmul.f32 %v237, %v221
    %v254 = vmul.f32 %v238, %v222
    %v255 = vmul.f32 %v239, %v223
    %v256 = vmul.f32 %v240, %v224
    %v257 = vmul.f32 %v241, %v225
    %v258 = vmul.f32 %v242, %v226
    %v259 = vadd.f32 %v51, %v243
    %v260 = vadd.f32 %v52, %v244
    %v261 = vadd.f32 %v53, %v245
    %v262 = vadd.f32 %v54, %v246
    %v263 = vadd.f32 %v55, %v247
    %v264 = vadd.f32 %v56, %v248
    %v265 = vadd.f32 %v57, %v249
    %v266 = vadd.f32 %v58, %v250
    %v267 = vadd.f32 %v59, %v251
    %v268 = vadd.f32 %v60, %v252
    %v269 = vadd.f32 %v61, %v253
    %v270 = vadd.f32 %v62, %v254
    %v271 = vadd.f32 %v63, %v255
    %v272 = vadd.f32 %v64, %v256
    %v273 = vadd.f32 %v65, %v257
    %v274 = vadd.f32 %v66, %v258
    %v275 = vrcp.pop %v211
    %v276 = vmul.f32 1.0, %v275
    %v277 = vrcp.pop %v212
    %v278 = vmul.f32 1.0, %v277
    %v279 = vrcp.pop %v213
    %v280 = vmul.f32 1.0, %v279
    %v281 = vrcp.pop %v214
    %v282 = vmul.f32 1.0, %v281
    %v283 = vrcp.pop %v215
    %v284 = vmul.f32 1.0, %v283
    %v285 = vrcp.pop %v216
    %v286 = vmul.f32 1.0, %v285
    %v287 = vrcp.pop %v217
    %v288 = vmul.f32 1.0, %v287
    %v289 = vrcp.pop %v218
    %v290 = vmul.f32 1.0, %v289
    %v291 = vrcp.pop %v219
    %v292 = vmul.f32 1.0, %v291
    %v293 = vrcp.pop %v220
    %v294 = vmul.f32 1.0, %v293
    %v295 = vrcp.pop %v221
    %v296 = vmul.f32 1.0, %v295
    %v297 = vrcp.pop %v222
    %v298 = vmul.f32 1.0, %v297
    %v299 = vrcp.pop %v223
    %v300 = vmul.f32 1.0, %v299
    %v301 = vrcp.pop %v224
    %v302 = vmul.f32 1.0, %v301
    %v303 = vrcp.pop %v225
    %v304 = vmul.f32 1.0, %v303
    %v305 = vrcp.pop %v226
    %v306 = vmul.f32 1.0, %v305
    %v307 = vlog2.pop %v276
    %v308 = vmul.f32 %v307, 0.6931472
    %v309 = vlog2.pop %v278
    %v310 = vmul.f32 %v309, 0.6931472
    %v311 = vlog2.pop %v280
    %v312 = vmul.f32 %v311, 0.6931472
    %v313 = vlog2.pop %v282
    %v314 = vmul.f32 %v313, 0.6931472
    %v315 = vlog2.pop %v284
    %v316 = vmul.f32 %v315, 0.6931472
    %v317 = vlog2.pop %v286
    %v318 = vmul.f32 %v317, 0.6931472
    %v319 = vlog2.pop %v288
    %v320 = vmul.f32 %v319, 0.6931472
    %v321 = vlog2.pop %v290
    %v322 = vmul.f32 %v321, 0.6931472
    %v323 = vlog2.pop %v292
    %v324 = vmul.f32 %v323, 0.6931472
    %v325 = vlog2.pop %v294
    %v326 = vmul.f32 %v325, 0.6931472
    %v327 = vlog2.pop %v296
    %v328 = vmul.f32 %v327, 0.6931472
    %v329 = vlog2.pop %v298
    %v330 = vmul.f32 %v329, 0.6931472
    %v331 = vlog2.pop %v300
    %v332 = vmul.f32 %v331, 0.6931472
    %v333 = vlog2.pop %v302
    %v334 = vmul.f32 %v333, 0.6931472
    %v335 = vlog2.pop %v304
    %v336 = vmul.f32 %v335, 0.6931472
    %v337 = vlog2.pop %v306
    %v338 = vmul.f32 %v337, 0.6931472
    %v339 = vmul.f32 %v211, %v211
    %v340 = vmul.f32 %v212, %v212
    %v341 = vmul.f32 %v213, %v213
    %v342 = vmul.f32 %v214, %v214
    %v343 = vmul.f32 %v215, %v215
    %v344 = vmul.f32 %v216, %v216
    %v345 = vmul.f32 %v217, %v217
    %v346 = vmul.f32 %v218, %v218
    %v347 = vmul.f32 %v219, %v219
    %v348 = vmul.f32 %v220, %v220
    %v349 = vmul.f32 %v221, %v221
    %v350 = vmul.f32 %v222, %v222
    %v351 = vmul.f32 %v223, %v223
    %v352 = vmul.f32 %v224, %v224
    %v353 = vmul.f32 %v225, %v225
    %v354 = vmul.f32 %v226, %v226
    %v355 = vmul.f32 %v51, %v51
    %v356 = vmul.f32 %v52, %v52
    %v357 = vmul.f32 %v53, %v53
    %v358 = vmul.f32 %v54, %v54
    %v359 = vmul.f32 %v55, %v55
    %v360 = vmul.f32 %v56, %v56
    %v361 = vmul.f32 %v57, %v57
    %v362 = vmul.f32 %v58, %v58
    %v363 = vmul.f32 %v59, %v59
    %v364 = vmul.f32 %v60, %v60
    %v365 = vmul.f32 %v61, %v61
    %v366 = vmul.f32 %v62, %v62
    %v367 = vmul.f32 %v63, %v63
    %v368 = vmul.f32 %v64, %v64
    %v369 = vmul.f32 %v65, %v65
    %v370 = vmul.f32 %v66, %v66
    %v371 = vadd.f32 %v339, %v355
    %v372 = vadd.f32 %v340, %v356
    %v373 = vadd.f32 %v341, %v357
    %v374 = vadd.f32 %v342, %v358
    %v375 = vadd.f32 %v343, %v359
    %v376 = vadd.f32 %v344, %v360
    %v377 = vadd.f32 %v345, %v361
    %v378 = vadd.f32 %v346, %v362
    %v379 = vadd.f32 %v347, %v363
    %v380 = vadd.f32 %v348, %v364
    %v381 = vadd.f32 %v349, %v365
    %v382 = vadd.f32 %v350, %v366
    %v383 = vadd.f32 %v351, %v367
    %v384 = vadd.f32 %v352, %v368
    %v385 = vadd.f32 %v353, %v369
    %v386 = vadd.f32 %v354, %v370
    %v387 = vmul.f32 %v371, 0.5
    %v388 = vmul.f32 %v372, 0.5
    %v389 = vmul.f32 %v373, 0.5
    %v390 = vmul.f32 %v374, 0.5
    %v391 = vmul.f32 %v375, 0.5
    %v392 = vmul.f32 %v376, 0.5
    %v393 = vmul.f32 %v377, 0.5
    %v394 = vmul.f32 %v378, 0.5
    %v395 = vmul.f32 %v379, 0.5
    %v396 = vmul.f32 %v380, 0.5
    %v397 = vmul.f32 %v381, 0.5
    %v398 = vmul.f32 %v382, 0.5
    %v399 = vmul.f32 %v383, 0.5
    %v400 = vmul.f32 %v384, 0.5
    %v401 = vmul.f32 %v385, 0.5
    %v402 = vmul.f32 %v386, 0.5
    %v403 = vadd.f32 %v308, %v387
    %v404 = vadd.f32 %v310, %v388
    %v405 = vadd.f32 %v312, %v389
    %v406 = vadd.f32 %v314, %v390
    %v407 = vadd.f32 %v316, %v391
    %v408 = vadd.f32 %v318, %v392
    %v409 = vadd.f32 %v320, %v393
    %v410 = vadd.f32 %v322, %v394
    %v411 = vadd.f32 %v324, %v395
    %v412 = vadd.f32 %v326, %v396
    %v413 = vadd.f32 %v328, %v397
    %v414 = vadd.f32 %v330, %v398
    %v415 = vadd.f32 %v332, %v399
    %v416 = vadd.f32 %v334, %v400
    %v417 = vadd.f32 %v336, %v401
    %v418 = vadd.f32 %v338, %v402
    %v419 = vsub.f32 %v403, 0.5
    %v420 = vsub.f32 %v404, 0.5
    %v421 = vsub.f32 %v405, 0.5
    %v422 = vsub.f32 %v406, 0.5
    %v423 = vsub.f32 %v407, 0.5
    %v424 = vsub.f32 %v408, 0.5
    %v425 = vsub.f32 %v409, 0.5
    %v426 = vsub.f32 %v410, 0.5
    %v427 = vsub.f32 %v411, 0.5
    %v428 = vsub.f32 %v412, 0.5
    %v429 = vsub.f32 %v413, 0.5
    %v430 = vsub.f32 %v414, 0.5
    %v431 = vsub.f32 %v415, 0.5
    %v432 = vsub.f32 %v416, 0.5
    %v433 = vsub.f32 %v417, 0.5
    %v434 = vsub.f32 %v418, 0.5
    %v435 = vld [vmem:[%s3] sm:$0x1]
    %v436 = vld [vmem:[%s4] sm:$0x1]
    %v437 = vmax.f32 %v436, 0.0
    %v438 = vand.u32 2147483647, %v436
    %v439 = vsub.f32 0.0, %v438
    %v440 = vmul.f32 %v439, 1.442695
    %v441 = vpow.pop %v440
    %v442 = vadd.f32 %v441, 1.0
    %v443 = vlog2.pop %v442
    %v444 = vmul.f32 %v443, 0.6931472
    %v445 = vadd.f32 %v437, %v444
    %v446 = vld [vmem:[%s10] sm:$0x1]
    %v447 = vmul.f32 %v446, %v445
    %v448 = vadd.f32 %v435, %v447
    %v449 = vrcp.pop %v445
    %v450 = vmul.f32 1.0, %v449
    %v451 = vlog2.pop %v450
    %v452 = vmul.f32 %v451, 0.6931472
    %v453 = vmul.f32 %v445, %v445
    %v454 = vmul.f32 %v435, %v435
    %v455 = vadd.f32 %v453, %v454
    %v456 = vmul.f32 %v455, 0.5
    %v457 = vadd.f32 %v452, %v456
    %v458 = vsub.f32 %v457, 0.5
    %v459 = vadd.f32 %v419, %v420
    %v460 = vadd.f32 %v459, %v421
    %v461 = vadd.f32 %v460, %v422
    %v462 = vadd.f32 %v461, %v423
    %v463 = vadd.f32 %v462, %v424
    %v464 = vadd.f32 %v463, %v425
    %v465 = vadd.f32 %v464, %v426
    %v466 = vadd.f32 %v465, %v427
    %v467 = vadd.f32 %v466, %v428
    %v468 = vadd.f32 %v467, %v429
    %v469 = vadd.f32 %v468, %v430
    %v470 = vadd.f32 %v469, %v431
    %v471 = vadd.f32 %v470, %v432
    %v472 = vadd.f32 %v471, %v433
    %v473 = vadd.f32 %v472, %v434
    %v474 = vrot.slane %v473, 4
    %v475 = vadd.f32 %v473, %v474
    %v476 = vrot.slane %v475, 2
    %v477 = vadd.f32 %v475, %v476
    %v478 = vrot.slane %v477, 1
    %v479 = vadd.f32 %v477, %v478
    %v480 = vadd.f32 %v479, %v458
    %v481 = vpack.c.bf16 %v260, %v259
    %v482 = vpack.c.bf16 %v262, %v261
    %v483 = vpack.c.bf16 %v264, %v263
    %v484 = vpack.c.bf16 %v266, %v265
    %v485 = vpack.c.bf16 %v268, %v267
    %v486 = vpack.c.bf16 %v270, %v269
    %v487 = vpack.c.bf16 %v272, %v271
    %v488 = vpack.c.bf16 %v274, %v273
    %v490 = vlaneseq
    %v491 = vshrl.u32 %v490, 7
    %v492 = vsub.s32 0, %v491
    %v493 = vrot.slane %v448, %v492
    %495 = vmatprep.subr.bf16.mxu0 0
    %496 = vmatpush1.bf16.msra.mxu0 %v481
    %497 = vmatprep.subr.bf16.mxu0 0
    %498 = vmatpush1.bf16.msra.mxu0 %v482
    %499 = vmatprep.subr.bf16.mxu0 0
    %500 = vmatpush1.bf16.msra.mxu0 %v483
    %501 = vmatprep.subr.bf16.mxu0 0
    %502 = vmatpush1.bf16.msra.mxu0 %v484
    %503 = vmatprep.subr.bf16.mxu0 0
    %504 = vmatpush1.bf16.msra.mxu0 %v485
    %505 = vmatprep.subr.bf16.mxu0 0
    %506 = vmatpush1.bf16.msra.mxu0 %v486
    %507 = vmatprep.subr.bf16.mxu0 0
    %508 = vmatpush1.bf16.msra.mxu0 %v487
    %509 = vmatprep.subr.bf16.mxu0 0
    %510 = vmatpush1.bf16.msra.mxu0 %v488
    %511 = vmatprep.subr.bf16.mxu0 0
    %512 = vmatpush1.bf16.msra.mxu0 0
    %513 = vmatprep.subr.bf16.mxu0 0
    %514 = vmatpush1.bf16.msra.mxu0 0
    %515 = vmatprep.subr.bf16.mxu0 0
    %516 = vmatpush1.bf16.msra.mxu0 0
    %517 = vmatprep.subr.bf16.mxu0 0
    %518 = vmatpush1.bf16.msra.mxu0 0
    %519 = vmatprep.subr.bf16.mxu0 0
    %520 = vmatpush1.bf16.msra.mxu0 0
    %521 = vmatprep.subr.bf16.mxu0 0
    %522 = vmatpush1.bf16.msra.mxu0 0
    %523 = vmatprep.subr.bf16.mxu0 0
    %524 = vmatpush1.bf16.msra.mxu0 0
    %525 = vmatprep.subr.bf16.mxu0 0
    %526 = vmatpush1.bf16.msra.mxu0 0
    %527 = vmatprep.mubr.bf16.mxu0 0
    %528 = vmatmul.mubr.bf16.gmra.mrb[0].mxu0 %v50
    %v529 = vpop.f32.mrb[0].mxu0
    %v530 = vadd.f32 %v493, %v529
    %v531 = vpop.f32.mrb[0].mxu0
    %v532 = vpop.f32.mrb[0].mxu0
    %v533 = vpop.f32.mrb[0].mxu0
    %534 = vdwg.mxu0
    %v535 = vmax.f32 %v530, 0.0
    %v536 = vld [vmem:[%s5] sm:$0xff]
    %v537 = vld [vmem:[%s5 + $0x8] sm:$0xff]
    %v538 = vld [vmem:[%s5 + $0x10] sm:$0xff]
    %v539 = vld [vmem:[%s5 + $0x18] sm:$0xff]
    %v540 = vld [vmem:[%s5 + $0x20] sm:$0xff]
    %v541 = vld [vmem:[%s5 + $0x28] sm:$0xff]
    %v542 = vld [vmem:[%s5 + $0x30] sm:$0xff]
    %v543 = vld [vmem:[%s5 + $0x38] sm:$0xff]
    %v544 = vld [vmem:[%s5 + $0x40] sm:$0xff]
    %v545 = vld [vmem:[%s5 + $0x48] sm:$0xff]
    %v546 = vld [vmem:[%s5 + $0x50] sm:$0xff]
    %v547 = vld [vmem:[%s5 + $0x58] sm:$0xff]
    %v548 = vld [vmem:[%s5 + $0x60] sm:$0xff]
    %v549 = vld [vmem:[%s5 + $0x68] sm:$0xff]
    %v550 = vld [vmem:[%s5 + $0x70] sm:$0xff]
    %v551 = vld [vmem:[%s5 + $0x78] sm:$0xff]
    %v552 = vld [vmem:[%s6] sm:$0xff]
    %v553 = vld [vmem:[%s6 + $0x8] sm:$0xff]
    %v554 = vld [vmem:[%s6 + $0x10] sm:$0xff]
    %v555 = vld [vmem:[%s6 + $0x18] sm:$0xff]
    %v556 = vld [vmem:[%s6 + $0x20] sm:$0xff]
    %v557 = vld [vmem:[%s6 + $0x28] sm:$0xff]
    %v558 = vld [vmem:[%s6 + $0x30] sm:$0xff]
    %v559 = vld [vmem:[%s6 + $0x38] sm:$0xff]
    %v560 = vld [vmem:[%s6 + $0x40] sm:$0xff]
    %v561 = vld [vmem:[%s6 + $0x48] sm:$0xff]
    %v562 = vld [vmem:[%s6 + $0x50] sm:$0xff]
    %v563 = vld [vmem:[%s6 + $0x58] sm:$0xff]
    %v564 = vld [vmem:[%s6 + $0x60] sm:$0xff]
    %v565 = vld [vmem:[%s6 + $0x68] sm:$0xff]
    %v566 = vld [vmem:[%s6 + $0x70] sm:$0xff]
    %v567 = vld [vmem:[%s6 + $0x78] sm:$0xff]
    %v568 = vmax.f32 %v552, 0.0
    %v569 = vmax.f32 %v553, 0.0
    %v570 = vmax.f32 %v554, 0.0
    %v571 = vmax.f32 %v555, 0.0
    %v572 = vmax.f32 %v556, 0.0
    %v573 = vmax.f32 %v557, 0.0
    %v574 = vmax.f32 %v558, 0.0
    %v575 = vmax.f32 %v559, 0.0
    %v576 = vmax.f32 %v560, 0.0
    %v577 = vmax.f32 %v561, 0.0
    %v578 = vmax.f32 %v562, 0.0
    %v579 = vmax.f32 %v563, 0.0
    %v580 = vmax.f32 %v564, 0.0
    %v581 = vmax.f32 %v565, 0.0
    %v582 = vmax.f32 %v566, 0.0
    %v583 = vmax.f32 %v567, 0.0
    %v584 = vand.u32 2147483647, %v552
    %v585 = vand.u32 2147483647, %v553
    %v586 = vand.u32 2147483647, %v554
    %v587 = vand.u32 2147483647, %v555
    %v588 = vand.u32 2147483647, %v556
    %v589 = vand.u32 2147483647, %v557
    %v590 = vand.u32 2147483647, %v558
    %v591 = vand.u32 2147483647, %v559
    %v592 = vand.u32 2147483647, %v560
    %v593 = vand.u32 2147483647, %v561
    %v594 = vand.u32 2147483647, %v562
    %v595 = vand.u32 2147483647, %v563
    %v596 = vand.u32 2147483647, %v564
    %v597 = vand.u32 2147483647, %v565
    %v598 = vand.u32 2147483647, %v566
    %v599 = vand.u32 2147483647, %v567
    %v600 = vsub.f32 0.0, %v584
    %v601 = vsub.f32 0.0, %v585
    %v602 = vsub.f32 0.0, %v586
    %v603 = vsub.f32 0.0, %v587
    %v604 = vsub.f32 0.0, %v588
    %v605 = vsub.f32 0.0, %v589
    %v606 = vsub.f32 0.0, %v590
    %v607 = vsub.f32 0.0, %v591
    %v608 = vsub.f32 0.0, %v592
    %v609 = vsub.f32 0.0, %v593
    %v610 = vsub.f32 0.0, %v594
    %v611 = vsub.f32 0.0, %v595
    %v612 = vsub.f32 0.0, %v596
    %v613 = vsub.f32 0.0, %v597
    %v614 = vsub.f32 0.0, %v598
    %v615 = vsub.f32 0.0, %v599
    %v616 = vmul.f32 %v600, 1.442695
    %v617 = vpow.pop %v616
    %v618 = vmul.f32 %v601, 1.442695
    %v619 = vpow.pop %v618
    %v620 = vmul.f32 %v602, 1.442695
    %v621 = vpow.pop %v620
    %v622 = vmul.f32 %v603, 1.442695
    %v623 = vpow.pop %v622
    %v624 = vmul.f32 %v604, 1.442695
    %v625 = vpow.pop %v624
    %v626 = vmul.f32 %v605, 1.442695
    %v627 = vpow.pop %v626
    %v628 = vmul.f32 %v606, 1.442695
    %v629 = vpow.pop %v628
    %v630 = vmul.f32 %v607, 1.442695
    %v631 = vpow.pop %v630
    %v632 = vmul.f32 %v608, 1.442695
    %v633 = vpow.pop %v632
    %v634 = vmul.f32 %v609, 1.442695
    %v635 = vpow.pop %v634
    %v636 = vmul.f32 %v610, 1.442695
    %v637 = vpow.pop %v636
    %v638 = vmul.f32 %v611, 1.442695
    %v639 = vpow.pop %v638
    %v640 = vmul.f32 %v612, 1.442695
    %v641 = vpow.pop %v640
    %v642 = vmul.f32 %v613, 1.442695
    %v643 = vpow.pop %v642
    %v644 = vmul.f32 %v614, 1.442695
    %v645 = vpow.pop %v644
    %v646 = vmul.f32 %v615, 1.442695
    %v647 = vpow.pop %v646
    %v648 = vadd.f32 %v617, 1.0
    %v649 = vadd.f32 %v619, 1.0
    %v650 = vadd.f32 %v621, 1.0
    %v651 = vadd.f32 %v623, 1.0
    %v652 = vadd.f32 %v625, 1.0
    %v653 = vadd.f32 %v627, 1.0
    %v654 = vadd.f32 %v629, 1.0
    %v655 = vadd.f32 %v631, 1.0
    %v656 = vadd.f32 %v633, 1.0
    %v657 = vadd.f32 %v635, 1.0
    %v658 = vadd.f32 %v637, 1.0
    %v659 = vadd.f32 %v639, 1.0
    %v660 = vadd.f32 %v641, 1.0
    %v661 = vadd.f32 %v643, 1.0
    %v662 = vadd.f32 %v645, 1.0
    %v663 = vadd.f32 %v647, 1.0
    %v664 = vlog2.pop %v648
    %v665 = vmul.f32 %v664, 0.6931472
    %v666 = vlog2.pop %v649
    %v667 = vmul.f32 %v666, 0.6931472
    %v668 = vlog2.pop %v650
    %v669 = vmul.f32 %v668, 0.6931472
    %v670 = vlog2.pop %v651
    %v671 = vmul.f32 %v670, 0.6931472
    %v672 = vlog2.pop %v652
    %v673 = vmul.f32 %v672, 0.6931472
    %v674 = vlog2.pop %v653
    %v675 = vmul.f32 %v674, 0.6931472
    %v676 = vlog2.pop %v654
    %v677 = vmul.f32 %v676, 0.6931472
    %v678 = vlog2.pop %v655
    %v679 = vmul.f32 %v678, 0.6931472
    %v680 = vlog2.pop %v656
    %v681 = vmul.f32 %v680, 0.6931472
    %v682 = vlog2.pop %v657
    %v683 = vmul.f32 %v682, 0.6931472
    %v684 = vlog2.pop %v658
    %v685 = vmul.f32 %v684, 0.6931472
    %v686 = vlog2.pop %v659
    %v687 = vmul.f32 %v686, 0.6931472
    %v688 = vlog2.pop %v660
    %v689 = vmul.f32 %v688, 0.6931472
    %v690 = vlog2.pop %v661
    %v691 = vmul.f32 %v690, 0.6931472
    %v692 = vlog2.pop %v662
    %v693 = vmul.f32 %v692, 0.6931472
    %v694 = vlog2.pop %v663
    %v695 = vmul.f32 %v694, 0.6931472
    %v696 = vadd.f32 %v568, %v665
    %v697 = vadd.f32 %v569, %v667
    %v698 = vadd.f32 %v570, %v669
    %v699 = vadd.f32 %v571, %v671
    %v700 = vadd.f32 %v572, %v673
    %v701 = vadd.f32 %v573, %v675
    %v702 = vadd.f32 %v574, %v677
    %v703 = vadd.f32 %v575, %v679
    %v704 = vadd.f32 %v576, %v681
    %v705 = vadd.f32 %v577, %v683
    %v706 = vadd.f32 %v578, %v685
    %v707 = vadd.f32 %v579, %v687
    %v708 = vadd.f32 %v580, %v689
    %v709 = vadd.f32 %v581, %v691
    %v710 = vadd.f32 %v582, %v693
    %v711 = vadd.f32 %v583, %v695
    %v712 = vld [vmem:[%s11] sm:$0xff]
    %v713 = vld [vmem:[%s11 + $0x8] sm:$0xff]
    %v714 = vld [vmem:[%s11 + $0x10] sm:$0xff]
    %v715 = vld [vmem:[%s11 + $0x18] sm:$0xff]
    %v716 = vld [vmem:[%s11 + $0x20] sm:$0xff]
    %v717 = vld [vmem:[%s11 + $0x28] sm:$0xff]
    %v718 = vld [vmem:[%s11 + $0x30] sm:$0xff]
    %v719 = vld [vmem:[%s11 + $0x38] sm:$0xff]
    %v720 = vld [vmem:[%s11 + $0x40] sm:$0xff]
    %v721 = vld [vmem:[%s11 + $0x48] sm:$0xff]
    %v722 = vld [vmem:[%s11 + $0x50] sm:$0xff]
    %v723 = vld [vmem:[%s11 + $0x58] sm:$0xff]
    %v724 = vld [vmem:[%s11 + $0x60] sm:$0xff]
    %v725 = vld [vmem:[%s11 + $0x68] sm:$0xff]
    %v726 = vld [vmem:[%s11 + $0x70] sm:$0xff]
    %v727 = vld [vmem:[%s11 + $0x78] sm:$0xff]
    %v728 = vmul.f32 %v712, %v696
    %v729 = vmul.f32 %v713, %v697
    %v730 = vmul.f32 %v714, %v698
    %v731 = vmul.f32 %v715, %v699
    %v732 = vmul.f32 %v716, %v700
    %v733 = vmul.f32 %v717, %v701
    %v734 = vmul.f32 %v718, %v702
    %v735 = vmul.f32 %v719, %v703
    %v736 = vmul.f32 %v720, %v704
    %v737 = vmul.f32 %v721, %v705
    %v738 = vmul.f32 %v722, %v706
    %v739 = vmul.f32 %v723, %v707
    %v740 = vmul.f32 %v724, %v708
    %v741 = vmul.f32 %v725, %v709
    %v742 = vmul.f32 %v726, %v710
    %v743 = vmul.f32 %v727, %v711
    %v744 = vadd.f32 %v536, %v728
    %v745 = vadd.f32 %v537, %v729
    %v746 = vadd.f32 %v538, %v730
    %v747 = vadd.f32 %v539, %v731
    %v748 = vadd.f32 %v540, %v732
    %v749 = vadd.f32 %v541, %v733
    %v750 = vadd.f32 %v542, %v734
    %v751 = vadd.f32 %v543, %v735
    %v752 = vadd.f32 %v544, %v736
    %v753 = vadd.f32 %v545, %v737
    %v754 = vadd.f32 %v546, %v738
    %v755 = vadd.f32 %v547, %v739
    %v756 = vadd.f32 %v548, %v740
    %v757 = vadd.f32 %v549, %v741
    %v758 = vadd.f32 %v550, %v742
    %v759 = vadd.f32 %v551, %v743
    %v760 = vrcp.pop %v696
    %v761 = vmul.f32 1.0, %v760
    %v762 = vrcp.pop %v697
    %v763 = vmul.f32 1.0, %v762
    %v764 = vrcp.pop %v698
    %v765 = vmul.f32 1.0, %v764
    %v766 = vrcp.pop %v699
    %v767 = vmul.f32 1.0, %v766
    %v768 = vrcp.pop %v700
    %v769 = vmul.f32 1.0, %v768
    %v770 = vrcp.pop %v701
    %v771 = vmul.f32 1.0, %v770
    %v772 = vrcp.pop %v702
    %v773 = vmul.f32 1.0, %v772
    %v774 = vrcp.pop %v703
    %v775 = vmul.f32 1.0, %v774
    %v776 = vrcp.pop %v704
    %v777 = vmul.f32 1.0, %v776
    %v778 = vrcp.pop %v705
    %v779 = vmul.f32 1.0, %v778
    %v780 = vrcp.pop %v706
    %v781 = vmul.f32 1.0, %v780
    %v782 = vrcp.pop %v707
    %v783 = vmul.f32 1.0, %v782
    %v784 = vrcp.pop %v708
    %v785 = vmul.f32 1.0, %v784
    %v786 = vrcp.pop %v709
    %v787 = vmul.f32 1.0, %v786
    %v788 = vrcp.pop %v710
    %v789 = vmul.f32 1.0, %v788
    %v790 = vrcp.pop %v711
    %v791 = vmul.f32 1.0, %v790
    %v792 = vlog2.pop %v761
    %v793 = vmul.f32 %v792, 0.6931472
    %v794 = vlog2.pop %v763
    %v795 = vmul.f32 %v794, 0.6931472
    %v796 = vlog2.pop %v765
    %v797 = vmul.f32 %v796, 0.6931472
    %v798 = vlog2.pop %v767
    %v799 = vmul.f32 %v798, 0.6931472
    %v800 = vlog2.pop %v769
    %v801 = vmul.f32 %v800, 0.6931472
    %v802 = vlog2.pop %v771
    %v803 = vmul.f32 %v802, 0.6931472
    %v804 = vlog2.pop %v773
    %v805 = vmul.f32 %v804, 0.6931472
    %v806 = vlog2.pop %v775
    %v807 = vmul.f32 %v806, 0.6931472
    %v808 = vlog2.pop %v777
    %v809 = vmul.f32 %v808, 0.6931472
    %v810 = vlog2.pop %v779
    %v811 = vmul.f32 %v810, 0.6931472
    %v812 = vlog2.pop %v781
    %v813 = vmul.f32 %v812, 0.6931472
    %v814 = vlog2.pop %v783
    %v815 = vmul.f32 %v814, 0.6931472
    %v816 = vlog2.pop %v785
    %v817 = vmul.f32 %v816, 0.6931472
    %v818 = vlog2.pop %v787
    %v819 = vmul.f32 %v818, 0.6931472
    %v820 = vlog2.pop %v789
    %v821 = vmul.f32 %v820, 0.6931472
    %v822 = vlog2.pop %v791
    %v823 = vmul.f32 %v822, 0.6931472
    %v824 = vmul.f32 %v696, %v696
    %v825 = vmul.f32 %v697, %v697
    %v826 = vmul.f32 %v698, %v698
    %v827 = vmul.f32 %v699, %v699
    %v828 = vmul.f32 %v700, %v700
    %v829 = vmul.f32 %v701, %v701
    %v830 = vmul.f32 %v702, %v702
    %v831 = vmul.f32 %v703, %v703
    %v832 = vmul.f32 %v704, %v704
    %v833 = vmul.f32 %v705, %v705
    %v834 = vmul.f32 %v706, %v706
    %v835 = vmul.f32 %v707, %v707
    %v836 = vmul.f32 %v708, %v708
    %v837 = vmul.f32 %v709, %v709
    %v838 = vmul.f32 %v710, %v710
    %v839 = vmul.f32 %v711, %v711
    %v840 = vmul.f32 %v536, %v536
    %v841 = vmul.f32 %v537, %v537
    %v842 = vmul.f32 %v538, %v538
    %v843 = vmul.f32 %v539, %v539
    %v844 = vmul.f32 %v540, %v540
    %v845 = vmul.f32 %v541, %v541
    %v846 = vmul.f32 %v542, %v542
    %v847 = vmul.f32 %v543, %v543
    %v848 = vmul.f32 %v544, %v544
    %v849 = vmul.f32 %v545, %v545
    %v850 = vmul.f32 %v546, %v546
    %v851 = vmul.f32 %v547, %v547
    %v852 = vmul.f32 %v548, %v548
    %v853 = vmul.f32 %v549, %v549
    %v854 = vmul.f32 %v550, %v550
    %v855 = vmul.f32 %v551, %v551
    %v856 = vadd.f32 %v824, %v840
    %v857 = vadd.f32 %v825, %v841
    %v858 = vadd.f32 %v826, %v842
    %v859 = vadd.f32 %v827, %v843
    %v860 = vadd.f32 %v828, %v844
    %v861 = vadd.f32 %v829, %v845
    %v862 = vadd.f32 %v830, %v846
    %v863 = vadd.f32 %v831, %v847
    %v864 = vadd.f32 %v832, %v848
    %v865 = vadd.f32 %v833, %v849
    %v866 = vadd.f32 %v834, %v850
    %v867 = vadd.f32 %v835, %v851
    %v868 = vadd.f32 %v836, %v852
    %v869 = vadd.f32 %v837, %v853
    %v870 = vadd.f32 %v838, %v854
    %v871 = vadd.f32 %v839, %v855
    %v872 = vmul.f32 %v856, 0.5
    %v873 = vmul.f32 %v857, 0.5
    %v874 = vmul.f32 %v858, 0.5
    %v875 = vmul.f32 %v859, 0.5
    %v876 = vmul.f32 %v860, 0.5
    %v877 = vmul.f32 %v861, 0.5
    %v878 = vmul.f32 %v862, 0.5
    %v879 = vmul.f32 %v863, 0.5
    %v880 = vmul.f32 %v864, 0.5
    %v881 = vmul.f32 %v865, 0.5
    %v882 = vmul.f32 %v866, 0.5
    %v883 = vmul.f32 %v867, 0.5
    %v884 = vmul.f32 %v868, 0.5
    %v885 = vmul.f32 %v869, 0.5
    %v886 = vmul.f32 %v870, 0.5
    %v887 = vmul.f32 %v871, 0.5
    %v888 = vadd.f32 %v793, %v872
    %v889 = vadd.f32 %v795, %v873
    %v890 = vadd.f32 %v797, %v874
    %v891 = vadd.f32 %v799, %v875
    %v892 = vadd.f32 %v801, %v876
    %v893 = vadd.f32 %v803, %v877
    %v894 = vadd.f32 %v805, %v878
    %v895 = vadd.f32 %v807, %v879
    %v896 = vadd.f32 %v809, %v880
    %v897 = vadd.f32 %v811, %v881
    %v898 = vadd.f32 %v813, %v882
    %v899 = vadd.f32 %v815, %v883
    %v900 = vadd.f32 %v817, %v884
    %v901 = vadd.f32 %v819, %v885
    %v902 = vadd.f32 %v821, %v886
    %v903 = vadd.f32 %v823, %v887
    %v904 = vsub.f32 %v888, 0.5
    %v905 = vsub.f32 %v889, 0.5
    %v906 = vsub.f32 %v890, 0.5
    %v907 = vsub.f32 %v891, 0.5
    %v908 = vsub.f32 %v892, 0.5
    %v909 = vsub.f32 %v893, 0.5
    %v910 = vsub.f32 %v894, 0.5
    %v911 = vsub.f32 %v895, 0.5
    %v912 = vsub.f32 %v896, 0.5
    %v913 = vsub.f32 %v897, 0.5
    %v914 = vsub.f32 %v898, 0.5
    %v915 = vsub.f32 %v899, 0.5
    %v916 = vsub.f32 %v900, 0.5
    %v917 = vsub.f32 %v901, 0.5
    %v918 = vsub.f32 %v902, 0.5
    %v919 = vsub.f32 %v903, 0.5
    %v920 = vld [vmem:[%s7] sm:$0x1]
    %v921 = vld [vmem:[%s8] sm:$0x1]
    %v922 = vmax.f32 %v921, 0.0
    %v923 = vand.u32 2147483647, %v921
    %v924 = vsub.f32 0.0, %v923
    %v925 = vmul.f32 %v924, 1.442695
    %v926 = vpow.pop %v925
    %v927 = vadd.f32 %v926, 1.0
    %v928 = vlog2.pop %v927
    %v929 = vmul.f32 %v928, 0.6931472
    %v930 = vadd.f32 %v922, %v929
    %v931 = vld [vmem:[%s12] sm:$0x1]
    %v932 = vmul.f32 %v931, %v930
    %v933 = vadd.f32 %v920, %v932
    %v934 = vrcp.pop %v930
    %v935 = vmul.f32 1.0, %v934
    %v936 = vlog2.pop %v935
    %v937 = vmul.f32 %v936, 0.6931472
    %v938 = vmul.f32 %v930, %v930
    %v939 = vmul.f32 %v920, %v920
    %v940 = vadd.f32 %v938, %v939
    %v941 = vmul.f32 %v940, 0.5
    %v942 = vadd.f32 %v937, %v941
    %v943 = vsub.f32 %v942, 0.5
    %v944 = vadd.f32 %v904, %v905
    %v945 = vadd.f32 %v944, %v906
    %v946 = vadd.f32 %v945, %v907
    %v947 = vadd.f32 %v946, %v908
    %v948 = vadd.f32 %v947, %v909
    %v949 = vadd.f32 %v948, %v910
    %v950 = vadd.f32 %v949, %v911
    %v951 = vadd.f32 %v950, %v912
    %v952 = vadd.f32 %v951, %v913
    %v953 = vadd.f32 %v952, %v914
    %v954 = vadd.f32 %v953, %v915
    %v955 = vadd.f32 %v954, %v916
    %v956 = vadd.f32 %v955, %v917
    %v957 = vadd.f32 %v956, %v918
    %v958 = vadd.f32 %v957, %v919
    %v959 = vrot.slane %v958, 4
    %v960 = vadd.f32 %v958, %v959
    %v961 = vrot.slane %v960, 2
    %v962 = vadd.f32 %v960, %v961
    %v963 = vrot.slane %v962, 1
    %v964 = vadd.f32 %v962, %v963
    %v965 = vadd.f32 %v480, %v964
    %v966 = vadd.f32 %v965, %v943
    %v967 = vpack.c.bf16 %v535, %v535
    %v968 = vpack.c.bf16 %v745, %v744
    %v969 = vpack.c.bf16 %v747, %v746
    %v970 = vpack.c.bf16 %v749, %v748
    %v971 = vpack.c.bf16 %v751, %v750
    %v972 = vpack.c.bf16 %v753, %v752
    %v973 = vpack.c.bf16 %v755, %v754
    %v974 = vpack.c.bf16 %v757, %v756
    %v975 = vpack.c.bf16 %v759, %v758
    %v977 = vlaneseq
    %v978 = vshrl.u32 %v977, 7
    %v979 = vsub.s32 0, %v978
    %v980 = vrot.slane %v933, %v979
    %982 = vmatprep.subr.bf16.mxu0 0
    %983 = vmatpush1.bf16.msra.mxu0 %v968
    %984 = vmatprep.subr.bf16.mxu0 0
    %985 = vmatpush1.bf16.msra.mxu0 %v969
    %986 = vmatprep.subr.bf16.mxu0 0
    %987 = vmatpush1.bf16.msra.mxu0 %v970
    %988 = vmatprep.subr.bf16.mxu0 0
    %989 = vmatpush1.bf16.msra.mxu0 %v971
    %990 = vmatprep.subr.bf16.mxu0 0
    %991 = vmatpush1.bf16.msra.mxu0 %v972
    %992 = vmatprep.subr.bf16.mxu0 0
    %993 = vmatpush1.bf16.msra.mxu0 %v973
    %994 = vmatprep.subr.bf16.mxu0 0
    %995 = vmatpush1.bf16.msra.mxu0 %v974
    %996 = vmatprep.subr.bf16.mxu0 0
    %997 = vmatpush1.bf16.msra.mxu0 %v975
    %998 = vmatprep.subr.bf16.mxu0 0
    %999 = vmatpush1.bf16.msra.mxu0 0
    %1000 = vmatprep.subr.bf16.mxu0 0
    %1001 = vmatpush1.bf16.msra.mxu0 0
    %1002 = vmatprep.subr.bf16.mxu0 0
    %1003 = vmatpush1.bf16.msra.mxu0 0
    %1004 = vmatprep.subr.bf16.mxu0 0
    %1005 = vmatpush1.bf16.msra.mxu0 0
    %1006 = vmatprep.subr.bf16.mxu0 0
    %1007 = vmatpush1.bf16.msra.mxu0 0
    %1008 = vmatprep.subr.bf16.mxu0 0
    %1009 = vmatpush1.bf16.msra.mxu0 0
    %1010 = vmatprep.subr.bf16.mxu0 0
    %1011 = vmatpush1.bf16.msra.mxu0 0
    %1012 = vmatprep.subr.bf16.mxu0 0
    %1013 = vmatpush1.bf16.msra.mxu0 0
    %1014 = vmatprep.mubr.bf16.mxu0 0
    %1015 = vmatmul.mubr.bf16.gmra.mrb[0].mxu0 %v967
    %v1016 = vpop.f32.mrb[0].mxu0
    %v1017 = vadd.f32 %v980, %v1016
    %v1018 = vpop.f32.mrb[0].mxu0
    %v1019 = vpop.f32.mrb[0].mxu0
    %v1020 = vpop.f32.mrb[0].mxu0
    %1021 = vdwg.mxu0
    %v1022 = vadd.f32 %v1017, %v49
    %v1023 = vmax.f32 %v1022, 0.0
    %1024 = vst [vmem:[#allocation2] sm:$0xff] %v1023
    %vm1025 = vcmask 1040384
    %v1026 = vsel %vm1025, %v966, 0.0
    %1027 = vadd.xlane.f32.xlu0 %v1026
    %v1028 = vpop.xlane.xlu0 %1027
    %vm1029 = vcmask 0
    %1030 = vst.msk [vmem:[#allocation4] sm:$0x1] %vm1029, %v1028
    // Predicated region
    $region54: #{res_block_forward.1} parent=1 // pred_check
      _
    $region55: #{res_block_forward.1} parent=1 // pred_check_branch
      %1032 = sbr.rel (0) target = $region57
    $region56: #{res_block_forward.1} parent=1 // pred_region
      %s1034 = ssub.s32 128, 128
      %1035 = vsyncadd [#allocation3], %s1034
      %s1037 = sshll.u32 [#allocation2], 4
      %s1038 = int_to_ptr.vmem [resolvable:$true] %s1037
      %1040 = dma.vmem_to_hbm [thread:$0]  %s1038, 128, %s13, [#allocation3]
    $region57: #{res_block_forward.1} parent=1 // pred_fallthru
      _
    // Predicated region
    $region58: #{res_block_forward.1} parent=1 // pred_check
      _
    $region59: #{res_block_forward.1} parent=1 // pred_check_branch
      %1042 = sbr.rel (0) target = $region61
    $region60: #{res_block_forward.1} parent=1 // pred_region
      %s1044 = ssub.s32 16, 16
      %1045 = vsyncadd [#allocation5], %s1044
      %s1047 = sshll.u32 [#allocation4], 4
      %s1048 = int_to_ptr.vmem [resolvable:$true] %s1047
      %1050 = dma.vmem_to_hbm [thread:$0]  %s1048, 16, %s14, [#allocation5]
    $region61: #{res_block_forward.1} parent=1 // pred_fallthru
      _
    // Predicated region
    $region62: #{res_block_forward.1} parent=1 // pred_check
      _
    $region63: #{res_block_forward.1} parent=1 // pred_check_branch
      %1052 = sbr.rel (0) target = $region65
    $region64: #{res_block_forward.1} parent=1 // pred_region
      %1053 = dma.done [#allocation3], 128
    $region65: #{res_block_forward.1} parent=1 // pred_fallthru
      _
    // Predicated region
    $region66: #{res_block_forward.1} parent=1 // pred_check
      _
    $region67: #{res_block_forward.1} parent=1 // pred_check_branch
      %1055 = sbr.rel (0) target = $region69
    $region68: #{res_block_forward.1} parent=1 // pred_region
      %1056 = dma.done [#allocation5], 16
    $region69: #{res_block_forward.1} parent=1 // pred_fallthru
      _
    %1057 = vsyncpa [#allocation3], 1
    %1058 = vsyncpa [#allocation5], 1

</llo_original>
